<compile_context>
chip_gen: v7x
topology: tpu7x:2x2x1
jax: 0.10.0
libtpu: 0.0.40
codegen_flags: <defaults>
</compile_context>

<pallas_src>
import functools

import jax
import jax.numpy as jnp
from jax.experimental import pallas as pl
from jax.experimental.pallas import tpu as pltpu


def build_neuron_list(input_size, hidden_size):
    """Reproduces the layer-size construction in Autoencoder.__init__."""
    neuron_list = []
    running = input_size
    while running > hidden_size:
        neuron_list.append(running)
        running = running // 2
    neuron_list.append(hidden_size)
    return neuron_list


def _ae_kernel(activations, x_ref, w_ref, b_ref, out_ref):
    """Whole autoencoder forward for one batch tile (layers unrolled at trace time).

    x_ref  : (TM, D)    VMEM  batch tile (D = input_size)
    w_ref  : (L, D, D)  VMEM  zero-padded weights, stored (in, out) = PyTorch W.T
    b_ref  : (L, 1, D)  VMEM  zero-padded biases
    out_ref: (TM, D)    VMEM  reconstruction
    """
    h = x_ref[...].astype(jnp.float32)
    for i, act in enumerate(activations):
        # Uniform full-width (TM, D) @ (D, D) matmuls on the MXU; zero padding
        # makes this exactly equivalent to the per-layer (fan_in, fan_out) matmul.
        h = jnp.dot(h, w_ref[i], preferred_element_type=jnp.float32) + b_ref[i]
        if act == "relu":
            h = jnp.maximum(h, 0.0)
        else:  # sigmoid -> EUP logistic (own bundle slot), no VPU divide
            h = jax.nn.sigmoid(h)
    out_ref[...] = h.astype(out_ref.dtype)


def autoencoder_forward(x, w_all, b_all, activations):
    """x: (batch, D) float32; w_all: (L, D, D); b_all: (L, 1, D)."""
    batch, d = x.shape
    n_layers = w_all.shape[0]
    assert w_all.shape == (n_layers, d, d)
    assert b_all.shape == (n_layers, 1, d)

    # Batch tiling: large tiles amortize the ~0.35 us/step grid overhead and
    # keep the MXU streaming; for tiny batches run a single 8-row-aligned tile.
    if batch >= 512:
        tm = 512
    else:
        tm = max(8, -(-batch // 8) * 8)
    padded_batch = -(-batch // tm) * tm
    if padded_batch != batch:
        x = jnp.pad(x, ((0, padded_batch - batch), (0, 0)))

    kernel = functools.partial(_ae_kernel, tuple(activations))

    out = pl.pallas_call(
        kernel,
        out_shape=jax.ShapeDtypeStruct((padded_batch, d), x.dtype),
        grid_spec=pltpu.PrefetchScalarGridSpec(
            num_scalar_prefetch=0,
            grid=(padded_batch // tm,),
            in_specs=[
                pl.BlockSpec((tm, d), lambda i: (i, 0)),
                # Constant index_map -> params DMA'd once, resident across tiles.
                pl.BlockSpec((n_layers, d, d), lambda i: (0, 0, 0)),
                pl.BlockSpec((n_layers, 1, d), lambda i: (0, 0, 0)),
            ],
            out_specs=pl.BlockSpec((tm, d), lambda i: (i, 0)),
        ),
        compiler_params=pltpu.CompilerParams(
            dimension_semantics=("parallel",)),  # v7x: shard batch tiles over 2 TCs
    )(x, w_all, b_all)

    return out[:batch]


def init_params(key, input_size, hidden_size):
    """Deterministic init mimicking nn.Linear's U(-1/sqrt(fan_in), +1/sqrt(fan_in))."""
    neuron_list = build_neuron_list(input_size, hidden_size)
    length = len(neuron_list)

    layer_sizes = []
    activations = []
    # encoder: input_size -> ... -> hidden_size
    for i in range(length - 1):
        layer_sizes.append((neuron_list[i], neuron_list[i + 1]))
        activations.append("relu" if i != length - 2 else "sigmoid")
    # decoder: hidden_size -> ... -> input_size
    for i in range(length - 1, 0, -1):
        layer_sizes.append((neuron_list[i], neuron_list[i - 1]))
        activations.append("relu" if i != 1 else "sigmoid")

    params = []
    for fan_in, fan_out in layer_sizes:
        key, kw, kb = jax.random.split(key, 3)
        bound = 1.0 / (fan_in ** 0.5)
        # stored as (in, out) == PyTorch W.T, so kernel does h @ w + b
        w = jax.random.uniform(kw, (fan_in, fan_out), jnp.float32, -bound, bound)
        b = jax.random.uniform(kb, (fan_out,), jnp.float32, -bound, bound)
        params.append((w, b))
    return params, activations


def pack_params(params, max_dim):
    """Zero-pad all layers into single (L, D, D) weight and (L, 1, D) bias slabs."""
    n_layers = len(params)
    w_all = jnp.zeros((n_layers, max_dim, max_dim), jnp.float32)
    b_all = jnp.zeros((n_layers, 1, max_dim), jnp.float32)
    for i, (w, b) in enumerate(params):
        fi, fo = w.shape
        w_all = w_all.at[i, :fi, :fo].set(w)
        b_all = b_all.at[i, 0, :fo].set(b)
    return w_all, b_all


def reference_forward(x, params, activations):
    """Pure-JAX reference of the same forward (correctness check)."""
    h = x.astype(jnp.float32)
    for (w, b), act in zip(params, activations):
        h = h @ w + b
        h = jnp.maximum(h, 0.0) if act == "relu" else jax.nn.sigmoid(h)
    return h.astype(x.dtype)


if __name__ == "__main__":
    INPUT_SIZE = 32   # feature dim of the (padded) tabular input
    HIDDEN_SIZE = 4   # bottleneck; neuron_list = [32, 16, 8, 4]
    BATCH = 8

    key = jax.random.PRNGKey(0)
    key, kx = jax.random.split(key)
    x = jax.random.normal(kx, (BATCH, INPUT_SIZE), dtype=jnp.float32)

    params, activations = init_params(key, INPUT_SIZE, HIDDEN_SIZE)
    w_all, b_all = pack_params(params, INPUT_SIZE)

    out = autoencoder_forward(x, w_all, b_all, activations)
    out = jax.block_until_ready(out)

    ref = reference_forward(x, params, activations)
    assert out.shape == (BATCH, INPUT_SIZE)
    assert jnp.allclose(out, ref, atol=1e-5, rtol=1e-5)

    print("KERNEL_OK")
</pallas_src>

<mosaic_0001>
module attributes {stable_mosaic.version = 11 : i64} {
  func.func @_ae_kernel(%arg0: i32, %arg1: memref<8x32xf32, #tpu.memory_space<vmem>>, %arg2: memref<6x32x32xf32, #tpu.memory_space<vmem>>, %arg3: memref<6x1x32xf32, #tpu.memory_space<vmem>>, %arg4: memref<8x32xf32, #tpu.memory_space<vmem>>) attributes {dimension_semantics = [#tpu.dimension_semantics<parallel>], iteration_bounds = array<i64: 1>, scalar_prefetch = 0 : i64, scratch_operands = 0 : i64, tpu.core_type = #tpu.core_type<tc>, window_params = [{transform_indices = @transform_0, window_bounds = array<i64: 8, 32>}, {pipeline_mode = #tpu.pipeline_mode<synchronous>, transform_indices = @transform_1, window_bounds = array<i64: 6, 32, 32>}, {pipeline_mode = #tpu.pipeline_mode<synchronous>, transform_indices = @transform_2, window_bounds = array<i64: 6, 1, 32>}, {transform_indices = @transform_3, window_bounds = array<i64: 8, 32>}]} {
    %c0 = arith.constant 0 : index
    %c0_0 = arith.constant 0 : index
    %0 = vector.load %arg1[%c0, %c0_0] : memref<8x32xf32, #tpu.memory_space<vmem>>, vector<8x32xf32>
    %c0_1 = arith.constant 0 : index
    %c0_2 = arith.constant 0 : index
    %c0_3 = arith.constant 0 : index
    %1 = vector.load %arg2[%c0_1, %c0_2, %c0_3] : memref<6x32x32xf32, #tpu.memory_space<vmem>>, vector<1x32x32xf32>
    %2 = vector.shape_cast %1 : vector<1x32x32xf32> to vector<32x32xf32>
    %cst = arith.constant dense<0.000000e+00> : vector<8x32xf32>
    %3 = tpu.matmul %0, %2, %cst {dimension_numbers = #tpu.dot_dimension_numbers<[1], [0], [0], [1], [0, 0, 1, 1], [], []>} : vector<8x32xf32>, vector<32x32xf32>, vector<8x32xf32> -> vector<8x32xf32>
    %c0_4 = arith.constant 0 : index
    %c0_5 = arith.constant 0 : index
    %c0_6 = arith.constant 0 : index
    %4 = vector.load %arg3[%c0_4, %c0_5, %c0_6] : memref<6x1x32xf32, #tpu.memory_space<vmem>>, vector<1x1x32xf32>
    %5 = vector.shape_cast %4 : vector<1x1x32xf32> to vector<1x32xf32>
    %6 = vector.broadcast %5 : vector<1x32xf32> to vector<8x32xf32>
    %7 = arith.addf %3, %6 : vector<8x32xf32>
    %cst_7 = arith.constant 0.000000e+00 : f32
    %8 = vector.broadcast %cst_7 : f32 to vector<8x32xf32>
    %9 = arith.maximumf %7, %8 : vector<8x32xf32>
    %c1 = arith.constant 1 : index
    %c0_8 = arith.constant 0 : index
    %c0_9 = arith.constant 0 : index
    %10 = vector.load %arg2[%c1, %c0_8, %c0_9] : memref<6x32x32xf32, #tpu.memory_space<vmem>>, vector<1x32x32xf32>
    %11 = vector.shape_cast %10 : vector<1x32x32xf32> to vector<32x32xf32>
    %cst_10 = arith.constant dense<0.000000e+00> : vector<8x32xf32>
    %12 = tpu.matmul %9, %11, %cst_10 {dimension_numbers = #tpu.dot_dimension_numbers<[1], [0], [0], [1], [0, 0, 1, 1], [], []>} : vector<8x32xf32>, vector<32x32xf32>, vector<8x32xf32> -> vector<8x32xf32>
    %c1_11 = arith.constant 1 : index
    %c0_12 = arith.constant 0 : index
    %c0_13 = arith.constant 0 : index
    %13 = vector.load %arg3[%c1_11, %c0_12, %c0_13] : memref<6x1x32xf32, #tpu.memory_space<vmem>>, vector<1x1x32xf32>
    %14 = vector.shape_cast %13 : vector<1x1x32xf32> to vector<1x32xf32>
    %15 = vector.broadcast %14 : vector<1x32xf32> to vector<8x32xf32>
    %16 = arith.addf %12, %15 : vector<8x32xf32>
    %cst_14 = arith.constant 0.000000e+00 : f32
    %17 = vector.broadcast %cst_14 : f32 to vector<8x32xf32>
    %18 = arith.maximumf %16, %17 : vector<8x32xf32>
    %c2 = arith.constant 2 : index
    %c0_15 = arith.constant 0 : index
    %c0_16 = arith.constant 0 : index
    %19 = vector.load %arg2[%c2, %c0_15, %c0_16] : memref<6x32x32xf32, #tpu.memory_space<vmem>>, vector<1x32x32xf32>
    %20 = vector.shape_cast %19 : vector<1x32x32xf32> to vector<32x32xf32>
    %cst_17 = arith.constant dense<0.000000e+00> : vector<8x32xf32>
    %21 = tpu.matmul %18, %20, %cst_17 {dimension_numbers = #tpu.dot_dimension_numbers<[1], [0], [0], [1], [0, 0, 1, 1], [], []>} : vector<8x32xf32>, vector<32x32xf32>, vector<8x32xf32> -> vector<8x32xf32>
    %c2_18 = arith.constant 2 : index
    %c0_19 = arith.constant 0 : index
    %c0_20 = arith.constant 0 : index
    %22 = vector.load %arg3[%c2_18, %c0_19, %c0_20] : memref<6x1x32xf32, #tpu.memory_space<vmem>>, vector<1x1x32xf32>
    %23 = vector.shape_cast %22 : vector<1x1x32xf32> to vector<1x32xf32>
    %24 = vector.broadcast %23 : vector<1x32xf32> to vector<8x32xf32>
    %25 = arith.addf %21, %24 : vector<8x32xf32>
    %26 = arith.negf %25 : vector<8x32xf32>
    %27 = math.exp %26 : vector<8x32xf32>
    %cst_21 = arith.constant 1.000000e+00 : f32
    %28 = vector.broadcast %cst_21 : f32 to vector<8x32xf32>
    %29 = arith.addf %28, %27 : vector<8x32xf32>
    %30 = arith.divf %28, %29 : vector<8x32xf32>
    %c3 = arith.constant 3 : index
    %c0_22 = arith.constant 0 : index
    %c0_23 = arith.constant 0 : index
    %31 = vector.load %arg2[%c3, %c0_22, %c0_23] : memref<6x32x32xf32, #tpu.memory_space<vmem>>, vector<1x32x32xf32>
    %32 = vector.shape_cast %31 : vector<1x32x32xf32> to vector<32x32xf32>
    %cst_24 = arith.constant dense<0.000000e+00> : vector<8x32xf32>
    %33 = tpu.matmul %30, %32, %cst_24 {dimension_numbers = #tpu.dot_dimension_numbers<[1], [0], [0], [1], [0, 0, 1, 1], [], []>} : vector<8x32xf32>, vector<32x32xf32>, vector<8x32xf32> -> vector<8x32xf32>
    %c3_25 = arith.constant 3 : index
    %c0_26 = arith.constant 0 : index
    %c0_27 = arith.constant 0 : index
    %34 = vector.load %arg3[%c3_25, %c0_26, %c0_27] : memref<6x1x32xf32, #tpu.memory_space<vmem>>, vector<1x1x32xf32>
    %35 = vector.shape_cast %34 : vector<1x1x32xf32> to vector<1x32xf32>
    %36 = vector.broadcast %35 : vector<1x32xf32> to vector<8x32xf32>
    %37 = arith.addf %33, %36 : vector<8x32xf32>
    %cst_28 = arith.constant 0.000000e+00 : f32
    %38 = vector.broadcast %cst_28 : f32 to vector<8x32xf32>
    %39 = arith.maximumf %37, %38 : vector<8x32xf32>
    %c4 = arith.constant 4 : index
    %c0_29 = arith.constant 0 : index
    %c0_30 = arith.constant 0 : index
    %40 = vector.load %arg2[%c4, %c0_29, %c0_30] : memref<6x32x32xf32, #tpu.memory_space<vmem>>, vector<1x32x32xf32>
    %41 = vector.shape_cast %40 : vector<1x32x32xf32> to vector<32x32xf32>
    %cst_31 = arith.constant dense<0.000000e+00> : vector<8x32xf32>
    %42 = tpu.matmul %39, %41, %cst_31 {dimension_numbers = #tpu.dot_dimension_numbers<[1], [0], [0], [1], [0, 0, 1, 1], [], []>} : vector<8x32xf32>, vector<32x32xf32>, vector<8x32xf32> -> vector<8x32xf32>
    %c4_32 = arith.constant 4 : index
    %c0_33 = arith.constant 0 : index
    %c0_34 = arith.constant 0 : index
    %43 = vector.load %arg3[%c4_32, %c0_33, %c0_34] : memref<6x1x32xf32, #tpu.memory_space<vmem>>, vector<1x1x32xf32>
    %44 = vector.shape_cast %43 : vector<1x1x32xf32> to vector<1x32xf32>
    %45 = vector.broadcast %44 : vector<1x32xf32> to vector<8x32xf32>
    %46 = arith.addf %42, %45 : vector<8x32xf32>
    %cst_35 = arith.constant 0.000000e+00 : f32
    %47 = vector.broadcast %cst_35 : f32 to vector<8x32xf32>
    %48 = arith.maximumf %46, %47 : vector<8x32xf32>
    %c5 = arith.constant 5 : index
    %c0_36 = arith.constant 0 : index
    %c0_37 = arith.constant 0 : index
    %49 = vector.load %arg2[%c5, %c0_36, %c0_37] : memref<6x32x32xf32, #tpu.memory_space<vmem>>, vector<1x32x32xf32>
    %50 = vector.shape_cast %49 : vector<1x32x32xf32> to vector<32x32xf32>
    %cst_38 = arith.constant dense<0.000000e+00> : vector<8x32xf32>
    %51 = tpu.matmul %48, %50, %cst_38 {dimension_numbers = #tpu.dot_dimension_numbers<[1], [0], [0], [1], [0, 0, 1, 1], [], []>} : vector<8x32xf32>, vector<32x32xf32>, vector<8x32xf32> -> vector<8x32xf32>
    %c5_39 = arith.constant 5 : index
    %c0_40 = arith.constant 0 : index
    %c0_41 = arith.constant 0 : index
    %52 = vector.load %arg3[%c5_39, %c0_40, %c0_41] : memref<6x1x32xf32, #tpu.memory_space<vmem>>, vector<1x1x32xf32>
    %53 = vector.shape_cast %52 : vector<1x1x32xf32> to vector<1x32xf32>
    %54 = vector.broadcast %53 : vector<1x32xf32> to vector<8x32xf32>
    %55 = arith.addf %51, %54 : vector<8x32xf32>
    %56 = arith.negf %55 : vector<8x32xf32>
    %57 = math.exp %56 : vector<8x32xf32>
    %cst_42 = arith.constant 1.000000e+00 : f32
    %58 = vector.broadcast %cst_42 : f32 to vector<8x32xf32>
    %59 = arith.addf %58, %57 : vector<8x32xf32>
    %60 = arith.divf %58, %59 : vector<8x32xf32>
    %c0_43 = arith.constant 0 : index
    %c0_44 = arith.constant 0 : index
    %61 = vector.load %arg4[%c0_43, %c0_44] : memref<8x32xf32, #tpu.memory_space<vmem>>, vector<8x32xf32>
    tpu.vector_store %arg4[%c0_43, %c0_44], %60 {strides = array<i32>} : memref<8x32xf32, #tpu.memory_space<vmem>>, vector<8x32xf32>,
    return
  }
  func.func @transform_0(%arg0: i32) -> (i32, i32) {
    %c0_i32 = arith.constant 0 : i32
    %c0_i32_0 = arith.constant 0 : i32
    return %arg0, %c0_i32 : i32, i32
  }
  func.func @transform_1(%arg0: i32) -> (i32, i32, i32) {
    %c0_i32 = arith.constant 0 : i32
    %c0_i32_0 = arith.constant 0 : i32
    %c0_i32_1 = arith.constant 0 : i32
    %c0_i32_2 = arith.constant 0 : i32
    return %c0_i32, %c0_i32_0, %c0_i32_1 : i32, i32, i32
  }
  func.func @transform_2(%arg0: i32) -> (i32, i32, i32) {
    %c0_i32 = arith.constant 0 : i32
    %c0_i32_0 = arith.constant 0 : i32
    %c0_i32_1 = arith.constant 0 : i32
    %c0_i32_2 = arith.constant 0 : i32
    return %c0_i32, %c0_i32_0, %c0_i32_1 : i32, i32, i32
  }
  func.func @transform_3(%arg0: i32) -> (i32, i32) {
    %c0_i32 = arith.constant 0 : i32
    %c0_i32_0 = arith.constant 0 : i32
    return %arg0, %c0_i32 : i32, i32
  }
}

</mosaic_0001>

<llo_original>
// kernel: tpu_custom_call.1
$region0: #{tpu_custom_call.1}
  #allocation0 [shape = 'u32[]', space=smem, size = 0x4, offset = 0x4, fixed_abs, tag = 'smem constant byte address 0x4 - core index']
  #allocation1 [shape = 'u32[144,128]{1,0:T(1,128)}', space=vmem, size = 0x12000, scoped, tag = 'internal scratch']
  %s0 = inlined_call_operand.hbm [shape: f32[8,32], index: 0, kind: input, shape index: {}]
  %s1 = inlined_call_operand.hbm [shape: f32[6,32,32], index: 1, kind: input, shape index: {}]
  %s2 = inlined_call_operand.vmem [shape: f32[6,1,32], index: 2, kind: input, shape index: {}]
  %s3 = inlined_call_operand.hbm [shape: f32[8,32], index: 3, kind: output, shape index: {}]
  %s4 = sld [smem:[#allocation0]]
  $region30: #{tpu_custom_call.1} parent=0
    _
  %s6 = ssub.s32 1, %s4
  %s7 = scalar_select 0, %s6, %s4
  $region1: #{tpu_custom_call.1} parent=0
    #allocation2 [shape = 'u8[4096]{0}', space=vmem, size = 0x1000, scoped, tag = 'input window, operand 0, single buffered']
    #allocation3 [shape = 's32[1]{0}', space=sflag, size = 0x4, scoped, tag = 'scoped memory for tpu_custom_call.1']
    #allocation4 [shape = 's32[1]{0}', space=sflag, size = 0x4, scoped, tag = 'scoped memory for tpu_custom_call.1']
    #allocation5 [shape = 'u8[98304]{0}', space=vmem, size = 0x18000, scoped, tag = 'input window, operand 1, single buffered']
    #allocation6 [shape = 's32[1]{0}', space=sflag, size = 0x4, scoped, tag = 'scoped memory for tpu_custom_call.1']
    #allocation7 [shape = 'u8[4096]{0}', space=vmem, size = 0x1000, scoped, tag = 'output window, operand 0, single buffered']
    %8 = vsyncpa [#allocation3], 0
    %9 = vsyncpa [#allocation6], 0
    %10 = vsyncpa [#allocation4], 0
    // Predicated region
    $region2: #{tpu_custom_call.1} parent=1 // pred_check
      _
    $region3: #{tpu_custom_call.1} parent=1 // pred_check_branch
      %12 = sbr.rel (0) target = $region5
    $region4: #{tpu_custom_call.1} parent=1 // pred_region
      %s14 = ssub.s32 128, 128
      %15 = vsyncadd [#allocation3], %s14
      %s17 = sshll.u32 [#allocation2], 4
      %s18 = int_to_ptr.vmem [resolvable:$true] %s17
      %20 = dma.hbm_to_vmem [thread:$0]  %s0, 128, %s18, [#allocation3]
    $region5: #{tpu_custom_call.1} parent=1 // pred_fallthru
      _
    // Predicated region
    $region6: #{tpu_custom_call.1} parent=1 // pred_check
      _
    $region7: #{tpu_custom_call.1} parent=1 // pred_check_branch
      %22 = sbr.rel (0) target = $region9
    $region8: #{tpu_custom_call.1} parent=1 // pred_region
      %s24 = ssub.s32 3072, 3072
      %25 = vsyncadd [#allocation6], %s24
      %s26 = sshll.u32 [#allocation5], 4
      %s27 = int_to_ptr.vmem [resolvable:$true] %s26
      %32 = dma.hbm_to_vmem [thread:$0]  %s1, 3072, %s27, [#allocation6], 128, 128, 8
    $region9: #{tpu_custom_call.1} parent=1 // pred_fallthru
      _
    // Predicated region
    $region10: #{tpu_custom_call.1} parent=1 // pred_check
      _
    $region11: #{tpu_custom_call.1} parent=1 // pred_check_branch
      %34 = sbr.rel (0) target = $region13
    $region12: #{tpu_custom_call.1} parent=1 // pred_region
      _
    $region13: #{tpu_custom_call.1} parent=1 // pred_fallthru
      _
    // Predicated region
    $region14: #{tpu_custom_call.1} parent=1 // pred_check
      _
    $region15: #{tpu_custom_call.1} parent=1 // pred_check_branch
      %36 = sbr.rel (0) target = $region17
    $region16: #{tpu_custom_call.1} parent=1 // pred_region
      %37 = dma.done [#allocation3], 128
    $region17: #{tpu_custom_call.1} parent=1 // pred_fallthru
      _
    // Predicated region
    $region18: #{tpu_custom_call.1} parent=1 // pred_check
      _
    $region19: #{tpu_custom_call.1} parent=1 // pred_check_branch
      %39 = sbr.rel (0) target = $region21
    $region20: #{tpu_custom_call.1} parent=1 // pred_region
      %40 = dma.done [#allocation6], 3072
    $region21: #{tpu_custom_call.1} parent=1 // pred_fallthru
      _
    %v41 = vld [vmem:[#allocation2] sm:$0xff]
    %v42 = vld [vmem:[#allocation5] sm:$0xff]
    %v43 = vld [vmem:[#allocation5 + $0x8] sm:$0xff]
    %v44 = vld [vmem:[#allocation5 + $0x10] sm:$0xff]
    %v45 = vld [vmem:[#allocation5 + $0x18] sm:$0xff]
    %v46 = vld [vmem:[%s2] sm:$0x1]
    %v48 = vlaneseq
    %v49 = vshrl.u32 %v48, 7
    %v50 = vsub.s32 0, %v49
    %v51 = vrot.slane %v46, %v50
    %vm53 = vcmask 261120
    %v55 = vsel %vm53, %v41, 0
    %57 = vmatprep.subr.mxu0 0.0
    %58 = vmatpush1.msra.mxu0 %v42
    %59 = vmatprep.subr.mxu0 0.0
    %60 = vmatpush1.msra.mxu0 %v43
    %61 = vmatprep.subr.mxu0 0.0
    %62 = vmatpush1.msra.mxu0 %v44
    %63 = vmatprep.subr.mxu0 0.0
    %64 = vmatpush1.msra.mxu0 %v45
    %65 = vmatprep.subr.mxu0 0.0
    %66 = vmatpush1.msra.mxu0 0.0
    %67 = vmatprep.subr.mxu0 0.0
    %68 = vmatpush1.msra.mxu0 0.0
    %69 = vmatprep.subr.mxu0 0.0
    %70 = vmatpush1.msra.mxu0 0.0
    %71 = vmatprep.subr.mxu0 0.0
    %72 = vmatpush1.msra.mxu0 0.0
    %73 = vmatprep.subr.mxu0 0.0
    %74 = vmatpush1.msra.mxu0 0.0
    %75 = vmatprep.subr.mxu0 0.0
    %76 = vmatpush1.msra.mxu0 0.0
    %77 = vmatprep.subr.mxu0 0.0
    %78 = vmatpush1.msra.mxu0 0.0
    %79 = vmatprep.subr.mxu0 0.0
    %80 = vmatpush1.msra.mxu0 0.0
    %81 = vmatprep.subr.mxu0 0.0
    %82 = vmatpush1.msra.mxu0 0.0
    %83 = vmatprep.subr.mxu0 0.0
    %84 = vmatpush1.msra.mxu0 0.0
    %85 = vmatprep.subr.mxu0 0.0
    %86 = vmatpush1.msra.mxu0 0.0
    %87 = vmatprep.subr.mxu0 0.0
    %88 = vmatpush1.msra.mxu0 0.0
    %89 = vmatprep.subr.mxu0 0.0
    %90 = vmatpush1.msra.mxu0 0.0
    %91 = vmatprep.subr.mxu0 0.0
    %92 = vmatpush1.msra.mxu0 0.0
    %93 = vmatprep.subr.mxu0 0.0
    %94 = vmatpush1.msra.mxu0 0.0
    %95 = vmatprep.subr.mxu0 0.0
    %96 = vmatpush1.msra.mxu0 0.0
    %97 = vmatprep.subr.mxu0 0.0
    %98 = vmatpush1.msra.mxu0 0.0
    %99 = vmatprep.subr.mxu0 0.0
    %100 = vmatpush1.msra.mxu0 0.0
    %101 = vmatprep.subr.mxu0 0.0
    %102 = vmatpush1.msra.mxu0 0.0
    %103 = vmatprep.subr.mxu0 0.0
    %104 = vmatpush1.msra.mxu0 0.0
    %105 = vmatprep.subr.mxu0 0.0
    %106 = vmatpush1.msra.mxu0 0.0
    %107 = vmatprep.subr.mxu0 0.0
    %108 = vmatpush1.msra.mxu0 0.0
    %109 = vmatprep.subr.mxu0 0.0
    %110 = vmatpush1.msra.mxu0 0.0
    %111 = vmatprep.subr.mxu0 0.0
    %112 = vmatpush1.msra.mxu0 0.0
    %113 = vmatprep.subr.mxu0 0.0
    %114 = vmatpush1.msra.mxu0 0.0
    %115 = vmatprep.subr.mxu0 0.0
    %116 = vmatpush1.msra.mxu0 0.0
    %117 = vmatprep.subr.mxu0 0.0
    %118 = vmatpush1.msra.mxu0 0.0
    %119 = vmatprep.subr.mxu0 0.0
    %120 = vmatpush1.msra.mxu0 0.0
    %121 = vmatprep.mubr.f32.mxu0 0.0
    %122 = vmatmul.mubr.f32.gmra.mrb[0].mxu0 %v55
    %v123 = vpop.f32.mrb[0].mxu0
    %v124 = vadd.f32 %v51, %v123
    %v125 = vpop.f32.mrb[0].mxu0
    %126 = vdwg.mxu0
    %v127 = vmax.f32 %v124, 0.0
    %s128 = scalar_lea.vmem [#allocation5], 32
    %v129 = vld [vmem:[%s128] sm:$0xff]
    %v130 = vld [vmem:[%s128 + $0x8] sm:$0xff]
    %v131 = vld [vmem:[%s128 + $0x10] sm:$0xff]
    %v132 = vld [vmem:[%s128 + $0x18] sm:$0xff]
    %s133 = scalar_lea.vmem %s2, 1
    %v134 = vld [vmem:[%s133] sm:$0x1]
    %v136 = vlaneseq
    %v137 = vshrl.u32 %v136, 7
    %v138 = vsub.s32 0, %v137
    %v139 = vrot.slane %v134, %v138
    %v142 = vsel %vm53, %v127, 0
    %144 = vmatprep.subr.mxu0 0.0
    %145 = vmatpush1.msra.mxu0 %v129
    %146 = vmatprep.subr.mxu0 0.0
    %147 = vmatpush1.msra.mxu0 %v130
    %148 = vmatprep.subr.mxu0 0.0
    %149 = vmatpush1.msra.mxu0 %v131
    %150 = vmatprep.subr.mxu0 0.0
    %151 = vmatpush1.msra.mxu0 %v132
    %152 = vmatprep.subr.mxu0 0.0
    %153 = vmatpush1.msra.mxu0 0.0
    %154 = vmatprep.subr.mxu0 0.0
    %155 = vmatpush1.msra.mxu0 0.0
    %156 = vmatprep.subr.mxu0 0.0
    %157 = vmatpush1.msra.mxu0 0.0
    %158 = vmatprep.subr.mxu0 0.0
    %159 = vmatpush1.msra.mxu0 0.0
    %160 = vmatprep.subr.mxu0 0.0
    %161 = vmatpush1.msra.mxu0 0.0
    %162 = vmatprep.subr.mxu0 0.0
    %163 = vmatpush1.msra.mxu0 0.0
    %164 = vmatprep.subr.mxu0 0.0
    %165 = vmatpush1.msra.mxu0 0.0
    %166 = vmatprep.subr.mxu0 0.0
    %167 = vmatpush1.msra.mxu0 0.0
    %168 = vmatprep.subr.mxu0 0.0
    %169 = vmatpush1.msra.mxu0 0.0
    %170 = vmatprep.subr.mxu0 0.0
    %171 = vmatpush1.msra.mxu0 0.0
    %172 = vmatprep.subr.mxu0 0.0
    %173 = vmatpush1.msra.mxu0 0.0
    %174 = vmatprep.subr.mxu0 0.0
    %175 = vmatpush1.msra.mxu0 0.0
    %176 = vmatprep.subr.mxu0 0.0
    %177 = vmatpush1.msra.mxu0 0.0
    %178 = vmatprep.subr.mxu0 0.0
    %179 = vmatpush1.msra.mxu0 0.0
    %180 = vmatprep.subr.mxu0 0.0
    %181 = vmatpush1.msra.mxu0 0.0
    %182 = vmatprep.subr.mxu0 0.0
    %183 = vmatpush1.msra.mxu0 0.0
    %184 = vmatprep.subr.mxu0 0.0
    %185 = vmatpush1.msra.mxu0 0.0
    %186 = vmatprep.subr.mxu0 0.0
    %187 = vmatpush1.msra.mxu0 0.0
    %188 = vmatprep.subr.mxu0 0.0
    %189 = vmatpush1.msra.mxu0 0.0
    %190 = vmatprep.subr.mxu0 0.0
    %191 = vmatpush1.msra.mxu0 0.0
    %192 = vmatprep.subr.mxu0 0.0
    %193 = vmatpush1.msra.mxu0 0.0
    %194 = vmatprep.subr.mxu0 0.0
    %195 = vmatpush1.msra.mxu0 0.0
    %196 = vmatprep.subr.mxu0 0.0
    %197 = vmatpush1.msra.mxu0 0.0
    %198 = vmatprep.subr.mxu0 0.0
    %199 = vmatpush1.msra.mxu0 0.0
    %200 = vmatprep.subr.mxu0 0.0
    %201 = vmatpush1.msra.mxu0 0.0
    %202 = vmatprep.subr.mxu0 0.0
    %203 = vmatpush1.msra.mxu0 0.0
    %204 = vmatprep.subr.mxu0 0.0
    %205 = vmatpush1.msra.mxu0 0.0
    %206 = vmatprep.subr.mxu0 0.0
    %207 = vmatpush1.msra.mxu0 0.0
    %208 = vmatprep.mubr.f32.mxu0 0.0
    %209 = vmatmul.mubr.f32.gmra.mrb[0].mxu0 %v142
    %v210 = vpop.f32.mrb[0].mxu0
    %v211 = vadd.f32 %v139, %v210
    %v212 = vpop.f32.mrb[0].mxu0
    %213 = vdwg.mxu0
    %v214 = vmax.f32 %v211, 0.0
    %s215 = scalar_lea.vmem [#allocation5], 64
    %v216 = vld [vmem:[%s215] sm:$0xff]
    %v217 = vld [vmem:[%s215 + $0x8] sm:$0xff]
    %v218 = vld [vmem:[%s215 + $0x10] sm:$0xff]
    %v219 = vld [vmem:[%s215 + $0x18] sm:$0xff]
    %s220 = scalar_lea.vmem %s2, 2
    %v221 = vld [vmem:[%s220] sm:$0x1]
    %v223 = vlaneseq
    %v224 = vshrl.u32 %v223, 7
    %v225 = vsub.s32 0, %v224
    %v226 = vrot.slane %v221, %v225
    %v229 = vsel %vm53, %v214, 0
    %231 = vmatprep.subr.mxu0 0.0
    %232 = vmatpush1.msra.mxu0 %v216
    %233 = vmatprep.subr.mxu0 0.0
    %234 = vmatpush1.msra.mxu0 %v217
    %235 = vmatprep.subr.mxu0 0.0
    %236 = vmatpush1.msra.mxu0 %v218
    %237 = vmatprep.subr.mxu0 0.0
    %238 = vmatpush1.msra.mxu0 %v219
    %239 = vmatprep.subr.mxu0 0.0
    %240 = vmatpush1.msra.mxu0 0.0
    %241 = vmatprep.subr.mxu0 0.0
    %242 = vmatpush1.msra.mxu0 0.0
    %243 = vmatprep.subr.mxu0 0.0
    %244 = vmatpush1.msra.mxu0 0.0
    %245 = vmatprep.subr.mxu0 0.0
    %246 = vmatpush1.msra.mxu0 0.0
    %247 = vmatprep.subr.mxu0 0.0
    %248 = vmatpush1.msra.mxu0 0.0
    %249 = vmatprep.subr.mxu0 0.0
    %250 = vmatpush1.msra.mxu0 0.0
    %251 = vmatprep.subr.mxu0 0.0
    %252 = vmatpush1.msra.mxu0 0.0
    %253 = vmatprep.subr.mxu0 0.0
    %254 = vmatpush1.msra.mxu0 0.0
    %255 = vmatprep.subr.mxu0 0.0
    %256 = vmatpush1.msra.mxu0 0.0
    %257 = vmatprep.subr.mxu0 0.0
    %258 = vmatpush1.msra.mxu0 0.0
    %259 = vmatprep.subr.mxu0 0.0
    %260 = vmatpush1.msra.mxu0 0.0
    %261 = vmatprep.subr.mxu0 0.0
    %262 = vmatpush1.msra.mxu0 0.0
    %263 = vmatprep.subr.mxu0 0.0
    %264 = vmatpush1.msra.mxu0 0.0
    %265 = vmatprep.subr.mxu0 0.0
    %266 = vmatpush1.msra.mxu0 0.0
    %267 = vmatprep.subr.mxu0 0.0
    %268 = vmatpush1.msra.mxu0 0.0
    %269 = vmatprep.subr.mxu0 0.0
    %270 = vmatpush1.msra.mxu0 0.0
    %271 = vmatprep.subr.mxu0 0.0
    %272 = vmatpush1.msra.mxu0 0.0
    %273 = vmatprep.subr.mxu0 0.0
    %274 = vmatpush1.msra.mxu0 0.0
    %275 = vmatprep.subr.mxu0 0.0
    %276 = vmatpush1.msra.mxu0 0.0
    %277 = vmatprep.subr.mxu0 0.0
    %278 = vmatpush1.msra.mxu0 0.0
    %279 = vmatprep.subr.mxu0 0.0
    %280 = vmatpush1.msra.mxu0 0.0
    %281 = vmatprep.subr.mxu0 0.0
    %282 = vmatpush1.msra.mxu0 0.0
    %283 = vmatprep.subr.mxu0 0.0
    %284 = vmatpush1.msra.mxu0 0.0
    %285 = vmatprep.subr.mxu0 0.0
    %286 = vmatpush1.msra.mxu0 0.0
    %287 = vmatprep.subr.mxu0 0.0
    %288 = vmatpush1.msra.mxu0 0.0
    %289 = vmatprep.subr.mxu0 0.0
    %290 = vmatpush1.msra.mxu0 0.0
    %291 = vmatprep.subr.mxu0 0.0
    %292 = vmatpush1.msra.mxu0 0.0
    %293 = vmatprep.subr.mxu0 0.0
    %294 = vmatpush1.msra.mxu0 0.0
    %295 = vmatprep.mubr.f32.mxu0 0.0
    %296 = vmatmul.mubr.f32.gmra.mrb[0].mxu0 %v229
    %v297 = vpop.f32.mrb[0].mxu0
    %v298 = vadd.f32 %v226, %v297
    %v299 = vpop.f32.mrb[0].mxu0
    %300 = vdwg.mxu0
    %v301 = vxor.u32 %v298, 2147483648
    %v302 = vmul.f32 %v301, 1.442695
    %v303 = vpow.pop %v302
    %v304 = vadd.f32 %v303, 1.0
    %v305 = vrcp.pop %v304
    %v306 = vmul.f32 1.0, %v305
    %s307 = scalar_lea.vmem [#allocation5], 96
    %v308 = vld [vmem:[%s307] sm:$0xff]
    %v309 = vld [vmem:[%s307 + $0x8] sm:$0xff]
    %v310 = vld [vmem:[%s307 + $0x10] sm:$0xff]
    %v311 = vld [vmem:[%s307 + $0x18] sm:$0xff]
    %s312 = scalar_lea.vmem %s2, 3
    %v313 = vld [vmem:[%s312] sm:$0x1]
    %v315 = vlaneseq
    %v316 = vshrl.u32 %v315, 7
    %v317 = vsub.s32 0, %v316
    %v318 = vrot.slane %v313, %v317
    %v321 = vsel %vm53, %v306, 0
    %323 = vmatprep.subr.mxu0 0.0
    %324 = vmatpush1.msra.mxu0 %v308
    %325 = vmatprep.subr.mxu0 0.0
    %326 = vmatpush1.msra.mxu0 %v309
    %327 = vmatprep.subr.mxu0 0.0
    %328 = vmatpush1.msra.mxu0 %v310
    %329 = vmatprep.subr.mxu0 0.0
    %330 = vmatpush1.msra.mxu0 %v311
    %331 = vmatprep.subr.mxu0 0.0
    %332 = vmatpush1.msra.mxu0 0.0
    %333 = vmatprep.subr.mxu0 0.0
    %334 = vmatpush1.msra.mxu0 0.0
    %335 = vmatprep.subr.mxu0 0.0
    %336 = vmatpush1.msra.mxu0 0.0
    %337 = vmatprep.subr.mxu0 0.0
    %338 = vmatpush1.msra.mxu0 0.0
    %339 = vmatprep.subr.mxu0 0.0
    %340 = vmatpush1.msra.mxu0 0.0
    %341 = vmatprep.subr.mxu0 0.0
    %342 = vmatpush1.msra.mxu0 0.0
    %343 = vmatprep.subr.mxu0 0.0
    %344 = vmatpush1.msra.mxu0 0.0
    %345 = vmatprep.subr.mxu0 0.0
    %346 = vmatpush1.msra.mxu0 0.0
    %347 = vmatprep.subr.mxu0 0.0
    %348 = vmatpush1.msra.mxu0 0.0
    %349 = vmatprep.subr.mxu0 0.0
    %350 = vmatpush1.msra.mxu0 0.0
    %351 = vmatprep.subr.mxu0 0.0
    %352 = vmatpush1.msra.mxu0 0.0
    %353 = vmatprep.subr.mxu0 0.0
    %354 = vmatpush1.msra.mxu0 0.0
    %355 = vmatprep.subr.mxu0 0.0
    %356 = vmatpush1.msra.mxu0 0.0
    %357 = vmatprep.subr.mxu0 0.0
    %358 = vmatpush1.msra.mxu0 0.0
    %359 = vmatprep.subr.mxu0 0.0
    %360 = vmatpush1.msra.mxu0 0.0
    %361 = vmatprep.subr.mxu0 0.0
    %362 = vmatpush1.msra.mxu0 0.0
    %363 = vmatprep.subr.mxu0 0.0
    %364 = vmatpush1.msra.mxu0 0.0
    %365 = vmatprep.subr.mxu0 0.0
    %366 = vmatpush1.msra.mxu0 0.0
    %367 = vmatprep.subr.mxu0 0.0
    %368 = vmatpush1.msra.mxu0 0.0
    %369 = vmatprep.subr.mxu0 0.0
    %370 = vmatpush1.msra.mxu0 0.0
    %371 = vmatprep.subr.mxu0 0.0
    %372 = vmatpush1.msra.mxu0 0.0
    %373 = vmatprep.subr.mxu0 0.0
    %374 = vmatpush1.msra.mxu0 0.0
    %375 = vmatprep.subr.mxu0 0.0
    %376 = vmatpush1.msra.mxu0 0.0
    %377 = vmatprep.subr.mxu0 0.0
    %378 = vmatpush1.msra.mxu0 0.0
    %379 = vmatprep.subr.mxu0 0.0
    %380 = vmatpush1.msra.mxu0 0.0
    %381 = vmatprep.subr.mxu0 0.0
    %382 = vmatpush1.msra.mxu0 0.0
    %383 = vmatprep.subr.mxu0 0.0
    %384 = vmatpush1.msra.mxu0 0.0
    %385 = vmatprep.subr.mxu0 0.0
    %386 = vmatpush1.msra.mxu0 0.0
    %387 = vmatprep.mubr.f32.mxu0 0.0
    %388 = vmatmul.mubr.f32.gmra.mrb[0].mxu0 %v321
    %v389 = vpop.f32.mrb[0].mxu0
    %v390 = vadd.f32 %v318, %v389
    %v391 = vpop.f32.mrb[0].mxu0
    %392 = vdwg.mxu0
    %v393 = vmax.f32 %v390, 0.0
    %s394 = scalar_lea.vmem [#allocation5], 128
    %v395 = vld [vmem:[%s394] sm:$0xff]
    %v396 = vld [vmem:[%s394 + $0x8] sm:$0xff]
    %v397 = vld [vmem:[%s394 + $0x10] sm:$0xff]
    %v398 = vld [vmem:[%s394 + $0x18] sm:$0xff]
    %s399 = scalar_lea.vmem %s2, 4
    %v400 = vld [vmem:[%s399] sm:$0x1]
    %v402 = vlaneseq
    %v403 = vshrl.u32 %v402, 7
    %v404 = vsub.s32 0, %v403
    %v405 = vrot.slane %v400, %v404
    %v408 = vsel %vm53, %v393, 0
    %410 = vmatprep.subr.mxu0 0.0
    %411 = vmatpush1.msra.mxu0 %v395
    %412 = vmatprep.subr.mxu0 0.0
    %413 = vmatpush1.msra.mxu0 %v396
    %414 = vmatprep.subr.mxu0 0.0
    %415 = vmatpush1.msra.mxu0 %v397
    %416 = vmatprep.subr.mxu0 0.0
    %417 = vmatpush1.msra.mxu0 %v398
    %418 = vmatprep.subr.mxu0 0.0
    %419 = vmatpush1.msra.mxu0 0.0
    %420 = vmatprep.subr.mxu0 0.0
    %421 = vmatpush1.msra.mxu0 0.0
    %422 = vmatprep.subr.mxu0 0.0
    %423 = vmatpush1.msra.mxu0 0.0
    %424 = vmatprep.subr.mxu0 0.0
    %425 = vmatpush1.msra.mxu0 0.0
    %426 = vmatprep.subr.mxu0 0.0
    %427 = vmatpush1.msra.mxu0 0.0
    %428 = vmatprep.subr.mxu0 0.0
    %429 = vmatpush1.msra.mxu0 0.0
    %430 = vmatprep.subr.mxu0 0.0
    %431 = vmatpush1.msra.mxu0 0.0
    %432 = vmatprep.subr.mxu0 0.0
    %433 = vmatpush1.msra.mxu0 0.0
    %434 = vmatprep.subr.mxu0 0.0
    %435 = vmatpush1.msra.mxu0 0.0
    %436 = vmatprep.subr.mxu0 0.0
    %437 = vmatpush1.msra.mxu0 0.0
    %438 = vmatprep.subr.mxu0 0.0
    %439 = vmatpush1.msra.mxu0 0.0
    %440 = vmatprep.subr.mxu0 0.0
    %441 = vmatpush1.msra.mxu0 0.0
    %442 = vmatprep.subr.mxu0 0.0
    %443 = vmatpush1.msra.mxu0 0.0
    %444 = vmatprep.subr.mxu0 0.0
    %445 = vmatpush1.msra.mxu0 0.0
    %446 = vmatprep.subr.mxu0 0.0
    %447 = vmatpush1.msra.mxu0 0.0
    %448 = vmatprep.subr.mxu0 0.0
    %449 = vmatpush1.msra.mxu0 0.0
    %450 = vmatprep.subr.mxu0 0.0
    %451 = vmatpush1.msra.mxu0 0.0
    %452 = vmatprep.subr.mxu0 0.0
    %453 = vmatpush1.msra.mxu0 0.0
    %454 = vmatprep.subr.mxu0 0.0
    %455 = vmatpush1.msra.mxu0 0.0
    %456 = vmatprep.subr.mxu0 0.0
    %457 = vmatpush1.msra.mxu0 0.0
    %458 = vmatprep.subr.mxu0 0.0
    %459 = vmatpush1.msra.mxu0 0.0
    %460 = vmatprep.subr.mxu0 0.0
    %461 = vmatpush1.msra.mxu0 0.0
    %462 = vmatprep.subr.mxu0 0.0
    %463 = vmatpush1.msra.mxu0 0.0
    %464 = vmatprep.subr.mxu0 0.0
    %465 = vmatpush1.msra.mxu0 0.0
    %466 = vmatprep.subr.mxu0 0.0
    %467 = vmatpush1.msra.mxu0 0.0
    %468 = vmatprep.subr.mxu0 0.0
    %469 = vmatpush1.msra.mxu0 0.0
    %470 = vmatprep.subr.mxu0 0.0
    %471 = vmatpush1.msra.mxu0 0.0
    %472 = vmatprep.subr.mxu0 0.0
    %473 = vmatpush1.msra.mxu0 0.0
    %474 = vmatprep.mubr.f32.mxu0 0.0
    %475 = vmatmul.mubr.f32.gmra.mrb[0].mxu0 %v408
    %v476 = vpop.f32.mrb[0].mxu0
    %v477 = vadd.f32 %v405, %v476
    %v478 = vpop.f32.mrb[0].mxu0
    %479 = vdwg.mxu0
    %v480 = vmax.f32 %v477, 0.0
    %s481 = scalar_lea.vmem [#allocation5], 160
    %v482 = vld [vmem:[%s481] sm:$0xff]
    %v483 = vld [vmem:[%s481 + $0x8] sm:$0xff]
    %v484 = vld [vmem:[%s481 + $0x10] sm:$0xff]
    %v485 = vld [vmem:[%s481 + $0x18] sm:$0xff]
    %s486 = scalar_lea.vmem %s2, 5
    %v487 = vld [vmem:[%s486] sm:$0x1]
    %v489 = vlaneseq
    %v490 = vshrl.u32 %v489, 7
    %v491 = vsub.s32 0, %v490
    %v492 = vrot.slane %v487, %v491
    %v495 = vsel %vm53, %v480, 0
    %497 = vmatprep.subr.mxu0 0.0
    %498 = vmatpush1.msra.mxu0 %v482
    %499 = vmatprep.subr.mxu0 0.0
    %500 = vmatpush1.msra.mxu0 %v483
    %501 = vmatprep.subr.mxu0 0.0
    %502 = vmatpush1.msra.mxu0 %v484
    %503 = vmatprep.subr.mxu0 0.0
    %504 = vmatpush1.msra.mxu0 %v485
    %505 = vmatprep.subr.mxu0 0.0
    %506 = vmatpush1.msra.mxu0 0.0
    %507 = vmatprep.subr.mxu0 0.0
    %508 = vmatpush1.msra.mxu0 0.0
    %509 = vmatprep.subr.mxu0 0.0
    %510 = vmatpush1.msra.mxu0 0.0
    %511 = vmatprep.subr.mxu0 0.0
    %512 = vmatpush1.msra.mxu0 0.0
    %513 = vmatprep.subr.mxu0 0.0
    %514 = vmatpush1.msra.mxu0 0.0
    %515 = vmatprep.subr.mxu0 0.0
    %516 = vmatpush1.msra.mxu0 0.0
    %517 = vmatprep.subr.mxu0 0.0
    %518 = vmatpush1.msra.mxu0 0.0
    %519 = vmatprep.subr.mxu0 0.0
    %520 = vmatpush1.msra.mxu0 0.0
    %521 = vmatprep.subr.mxu0 0.0
    %522 = vmatpush1.msra.mxu0 0.0
    %523 = vmatprep.subr.mxu0 0.0
    %524 = vmatpush1.msra.mxu0 0.0
    %525 = vmatprep.subr.mxu0 0.0
    %526 = vmatpush1.msra.mxu0 0.0
    %527 = vmatprep.subr.mxu0 0.0
    %528 = vmatpush1.msra.mxu0 0.0
    %529 = vmatprep.subr.mxu0 0.0
    %530 = vmatpush1.msra.mxu0 0.0
    %531 = vmatprep.subr.mxu0 0.0
    %532 = vmatpush1.msra.mxu0 0.0
    %533 = vmatprep.subr.mxu0 0.0
    %534 = vmatpush1.msra.mxu0 0.0
    %535 = vmatprep.subr.mxu0 0.0
    %536 = vmatpush1.msra.mxu0 0.0
    %537 = vmatprep.subr.mxu0 0.0
    %538 = vmatpush1.msra.mxu0 0.0
    %539 = vmatprep.subr.mxu0 0.0
    %540 = vmatpush1.msra.mxu0 0.0
    %541 = vmatprep.subr.mxu0 0.0
    %542 = vmatpush1.msra.mxu0 0.0
    %543 = vmatprep.subr.mxu0 0.0
    %544 = vmatpush1.msra.mxu0 0.0
    %545 = vmatprep.subr.mxu0 0.0
    %546 = vmatpush1.msra.mxu0 0.0
    %547 = vmatprep.subr.mxu0 0.0
    %548 = vmatpush1.msra.mxu0 0.0
    %549 = vmatprep.subr.mxu0 0.0
    %550 = vmatpush1.msra.mxu0 0.0
    %551 = vmatprep.subr.mxu0 0.0
    %552 = vmatpush1.msra.mxu0 0.0
    %553 = vmatprep.subr.mxu0 0.0
    %554 = vmatpush1.msra.mxu0 0.0
    %555 = vmatprep.subr.mxu0 0.0
    %556 = vmatpush1.msra.mxu0 0.0
    %557 = vmatprep.subr.mxu0 0.0
    %558 = vmatpush1.msra.mxu0 0.0
    %559 = vmatprep.subr.mxu0 0.0
    %560 = vmatpush1.msra.mxu0 0.0
    %561 = vmatprep.mubr.f32.mxu0 0.0
    %562 = vmatmul.mubr.f32.gmra.mrb[0].mxu0 %v495
    %v563 = vpop.f32.mrb[0].mxu0
    %v564 = vadd.f32 %v492, %v563
    %v565 = vpop.f32.mrb[0].mxu0
    %566 = vdwg.mxu0
    %v567 = vxor.u32 %v564, 2147483648
    %v568 = vmul.f32 %v567, 1.442695
    %v569 = vpow.pop %v568
    %v570 = vadd.f32 %v569, 1.0
    %v571 = vrcp.pop %v570
    %v572 = vmul.f32 1.0, %v571
    %573 = vst.msk [vmem:[#allocation7] sm:$0xff] %vm53, %v572
    // Predicated region
    $region22: #{tpu_custom_call.1} parent=1 // pred_check
      _
    $region23: #{tpu_custom_call.1} parent=1 // pred_check_branch
      %575 = sbr.rel (0) target = $region25
    $region24: #{tpu_custom_call.1} parent=1 // pred_region
      %s577 = ssub.s32 128, 128
      %578 = vsyncadd [#allocation4], %s577
      %s580 = sshll.u32 [#allocation7], 4
      %s581 = int_to_ptr.vmem [resolvable:$true] %s580
      %583 = dma.vmem_to_hbm [thread:$0]  %s581, 128, %s3, [#allocation4]
    $region25: #{tpu_custom_call.1} parent=1 // pred_fallthru
      _
    // Predicated region
    $region26: #{tpu_custom_call.1} parent=1 // pred_check
      _
    $region27: #{tpu_custom_call.1} parent=1 // pred_check_branch
      %585 = sbr.rel (0) target = $region29
    $region28: #{tpu_custom_call.1} parent=1 // pred_region
      %586 = dma.done [#allocation4], 128
    $region29: #{tpu_custom_call.1} parent=1 // pred_fallthru
      _
    %587 = vsyncpa [#allocation3], 1
    %588 = vsyncpa [#allocation6], 1
    %589 = vsyncpa [#allocation4], 1

</llo_original>
